<compile_context>
chip_gen: v6e
topology: v6e:2x2x1
jax: 0.10.0
libtpu: 0.0.40
codegen_flags: <defaults>
</compile_context>

<pallas_src>
import jax
import jax.numpy as jnp
from jax.experimental import pallas as pl
from jax.experimental.pallas import tpu as pltpu

HIDDEN_LOGICAL = 120       # PyTorch hidden width
HIDDEN_PADDED = 128        # lane-aligned hidden width used inside the kernel
_LANE = 128
_VMEM_TILE_BUDGET = 24 * 1024 * 1024   # keeps tiles inside v7x's 32 MiB scoped VMEM
_VMEM_LIMIT_CAP = 32 * 1024 * 1024     # safe scoped-VMEM limit on v5e/v6e/v7x


def _cnet_kernel(s_ref, a_ref, w1s_ref, w1a_ref, b1_ref, w2r_ref, b2_ref, o_ref):
    # s_ref  : (TB, s_dim)   a_ref  : (TB, a_dim)    (f32 or bf16)
    # w1s_ref: (s_dim, 128)  w1a_ref: (a_dim, 128)   (same dtype as s/a)
    # b1_ref : (1, 128) f32  w2r_ref: (1, 128) f32
    # b2_ref : (1, 1) f32 in SMEM
    # o_ref  : (1, TB) f32   (batch on lanes -> dense stores)
    h = jnp.dot(s_ref[...], w1s_ref[...], preferred_element_type=jnp.float32)
    h = h + jnp.dot(a_ref[...], w1a_ref[...], preferred_element_type=jnp.float32)
    h = jnp.maximum(h + b1_ref[...], 0.0)                       # ReLU, (TB, 128) f32

    # Layer 2: contract the hidden axis of (1,128) with (TB,128) -> (1,TB),
    # i.e. the q @ k.T pattern; batch lands on lanes so stores are unmasked.
    v = jax.lax.dot_general(
        w2r_ref[...], h,
        dimension_numbers=(((1,), (1,)), ((), ())),
        preferred_element_type=jnp.float32,
    )
    o_ref[...] = (v + b2_ref[0, 0]).astype(o_ref.dtype)


def _vmem_estimate_bytes(tb, s_dim, a_dim, hidden, in_itemsize):
    """Conservative VMEM footprint for one pipelined grid step.

    s/a tiles are lane-padded to 128 in VMEM (a (tb,16) f32 tile really
    occupies tb*128*4 bytes), and each streamed operand is double-buffered.
    The (tb, hidden) f32 activation is the largest in-kernel temporary.
    """
    pad_lane = lambda d: -(-d // _LANE) * _LANE
    s_bytes = 2 * tb * pad_lane(s_dim) * in_itemsize      # double-buffered s
    a_bytes = 2 * tb * pad_lane(a_dim) * in_itemsize      # double-buffered a
    o_bytes = 2 * 8 * tb * 4                              # (1, tb) out, sublane-padded
    h_bytes = tb * hidden * 4                             # f32 hidden activation
    tmp_bytes = tb * hidden * 4                           # dot temporaries headroom
    w_bytes = 512 * 1024                                  # weights/biases (generous)
    return s_bytes + a_bytes + o_bytes + h_bytes + tmp_bytes + w_bytes


def _choose_batch_tile(B, block_b, s_dim, a_dim, hidden, in_itemsize):
    """Pick a batch tile: multiple of 128 (lane-dense output block), shrunk to
    fit the per-generation-safe VMEM budget; full-extent B when it fits."""
    blk = max(_LANE, (min(int(block_b), 1 << 20) // _LANE) * _LANE)
    while blk > _LANE and _vmem_estimate_bytes(blk, s_dim, a_dim, hidden,
                                               in_itemsize) > _VMEM_TILE_BUDGET:
        blk -= _LANE
    if B <= blk:
        return B            # single tile; block == full extent is always legal
    return blk              # multiple of 128; final tile may be ragged (masked)


def cnet_forward(s, a, params, *, block_b=4096):
    """s: (B, s_dim), a: (B, a_dim) (f32 or bf16) -> value: (B, 1) f32."""
    w1_s, w1_a, b1, w2_row, b2 = params
    B, s_dim = s.shape
    a_dim = a.shape[1]
    H = w1_s.shape[1]
    in_itemsize = jnp.dtype(s.dtype).itemsize

    tb = _choose_batch_tile(B, block_b, s_dim, a_dim, H, in_itemsize)
    grid = (pl.cdiv(B, tb),)

    # Explicit scoped-VMEM budget sized for this tile (with 25% headroom),
    # clipped to a limit that is safe on every generation.
    est = _vmem_estimate_bytes(tb, s_dim, a_dim, H, in_itemsize)
    vmem_limit = int(min(_VMEM_LIMIT_CAP, max(16 * 1024 * 1024, 1.25 * est)))

    out_t = pl.pallas_call(
        _cnet_kernel,
        out_shape=jax.ShapeDtypeStruct((1, B), jnp.float32),
        grid=grid,
        in_specs=[
            pl.BlockSpec((tb, s_dim), lambda i: (i, 0)),        # s tile (streamed)
            pl.BlockSpec((tb, a_dim), lambda i: (i, 0)),        # a tile (streamed)
            pl.BlockSpec((s_dim, H), lambda i: (0, 0)),         # W1 (state part)
            pl.BlockSpec((a_dim, H), lambda i: (0, 0)),         # W1 (action part)
            pl.BlockSpec((1, H), lambda i: (0, 0)),             # b1
            pl.BlockSpec((1, H), lambda i: (0, 0)),             # W2 as a row
            pl.BlockSpec(memory_space=pltpu.MemorySpace.SMEM),  # b2 scalar
        ],
        out_specs=pl.BlockSpec((1, tb), lambda i: (0, i)),
        compiler_params=pltpu.CompilerParams(
            dimension_semantics=("parallel",),
            vmem_limit_bytes=vmem_limit,
        ),
    )(s, a, w1_s, w1_a, b1, w2_row, b2)

    # (1, B) and (B, 1) share the same row-major memory layout: free reshape.
    return out_t.reshape(B, 1)


def init_cnet_params(key, s_dim, a_dim, hidden=HIDDEN_LOGICAL):
    """Logical (unpadded) params mirroring the PyTorch module:
       weights ~ N(0, 0.01); biases ~ U(-1/sqrt(fan_in), 1/sqrt(fan_in))."""
    k1, k2, k3, k4 = jax.random.split(key, 4)
    d_in = s_dim + a_dim
    w1 = 0.01 * jax.random.normal(k1, (d_in, hidden), dtype=jnp.float32)
    bnd1 = 1.0 / jnp.sqrt(jnp.float32(d_in))
    b1 = jax.random.uniform(k2, (hidden,), minval=-bnd1, maxval=bnd1,
                            dtype=jnp.float32)
    w2 = 0.01 * jax.random.normal(k3, (hidden, 1), dtype=jnp.float32)
    bnd2 = 1.0 / jnp.sqrt(jnp.float32(hidden))
    b2 = jax.random.uniform(k4, (1,), minval=-bnd2, maxval=bnd2,
                            dtype=jnp.float32)
    return w1, b1, w2, b2


def prepare_params(logical_params, s_dim, hidden_padded=HIDDEN_PADDED,
                   in_dtype=jnp.float32):
    """Split W1 by (s, a) inputs and zero-pad the hidden dim to one lane tile.
    Zero padding is numerically exact (padded ReLU columns hit zero W2 rows).
    `in_dtype` lets the producer store the streamed W1 halves in bf16 to halve
    HBM traffic; biases and the W2 row stay f32 (added/contracted in f32)."""
    w1, b1, w2, b2 = logical_params
    H = w1.shape[1]
    pad = hidden_padded - H
    w1p = jnp.pad(w1, ((0, 0), (0, pad))).astype(in_dtype)     # (d_in, 128)
    b1p = jnp.pad(b1.reshape(1, H), ((0, 0), (0, pad)))        # (1, 128) f32
    w2r = jnp.pad(w2.reshape(1, H), ((0, 0), (0, pad)))        # (1, 128) f32
    w1_s = w1p[:s_dim]                                         # (s_dim, 128)
    w1_a = w1p[s_dim:]                                         # (a_dim, 128)
    b2p = b2.reshape(1, 1)                                     # (1, 1) -> SMEM
    return w1_s, w1_a, b1p, w2r, b2p


if __name__ == "__main__":
    # Small, forward-consistent shapes: batch=2, s_dim=16, a_dim=4.
    B, S_DIM, A_DIM = 2, 16, 4
    key = jax.random.PRNGKey(0)
    k_s, k_a, k_p, k_s2, k_a2 = jax.random.split(key, 5)

    s = jax.random.normal(k_s, (B, S_DIM), dtype=jnp.float32)
    a = jax.random.normal(k_a, (B, A_DIM), dtype=jnp.float32)
    logical = init_cnet_params(k_p, S_DIM, A_DIM)
    params = prepare_params(logical, S_DIM)

    value = cnet_forward(s, a, params)
    jax.block_until_ready(value)

    # Pure-JAX reference using the *unpadded* logical params.
    w1, b1, w2, b2 = logical
    x = jnp.concatenate([s, a], axis=1)
    ref = jnp.maximum(x @ w1 + b1, 0.0) @ w2 + b2
    assert value.shape == (B, 1)
    assert jnp.allclose(value, ref, atol=1e-5, rtol=1e-5)

    # Multi-step batch grid with a ragged final tile (300 = 2*128 + 44).
    B2 = 300
    s2 = jax.random.normal(k_s2, (B2, S_DIM), dtype=jnp.float32)
    a2 = jax.random.normal(k_a2, (B2, A_DIM), dtype=jnp.float32)
    value2 = cnet_forward(s2, a2, params, block_b=128)
    jax.block_until_ready(value2)
    x2 = jnp.concatenate([s2, a2], axis=1)
    ref2 = jnp.maximum(x2 @ w1 + b1, 0.0) @ w2 + b2
    assert value2.shape == (B2, 1)
    assert jnp.allclose(value2, ref2, atol=1e-5, rtol=1e-5)

    # bf16 streamed operands (producer-supplied): halves the dominant HBM read,
    # f32 accumulation preserved inside the kernel.
    params_bf16 = prepare_params(logical, S_DIM, in_dtype=jnp.bfloat16)
    value3 = cnet_forward(s2.astype(jnp.bfloat16), a2.astype(jnp.bfloat16),
                          params_bf16, block_b=128)
    jax.block_until_ready(value3)
    assert value3.shape == (B2, 1)
    assert jnp.allclose(value3, ref2, atol=2e-2, rtol=2e-2)

    print("KERNEL_OK")
</pallas_src>

<mosaic_0001>
module attributes {stable_mosaic.version = 11 : i64} {
  func.func @_cnet_kernel(%arg0: i32, %arg1: memref<2x16xf32, #tpu.memory_space<vmem>>, %arg2: memref<2x4xf32, #tpu.memory_space<vmem>>, %arg3: memref<16x128xf32, #tpu.memory_space<vmem>>, %arg4: memref<4x128xf32, #tpu.memory_space<vmem>>, %arg5: memref<1x128xf32, #tpu.memory_space<vmem>>, %arg6: memref<1x128xf32, #tpu.memory_space<vmem>>, %arg7: memref<1x1xf32, #tpu.memory_space<smem>>, %arg8: memref<1x2xf32, #tpu.memory_space<vmem>>) attributes {dimension_semantics = [#tpu.dimension_semantics<parallel>], iteration_bounds = array<i64: 1>, scalar_prefetch = 0 : i64, scratch_operands = 0 : i64, tpu.core_type = #tpu.core_type<tc>, window_params = [{transform_indices = @transform_0, window_bounds = array<i64: 2, 16>}, {transform_indices = @transform_1, window_bounds = array<i64: 2, 4>}, {pipeline_mode = #tpu.pipeline_mode<synchronous>, transform_indices = @transform_2, window_bounds = array<i64: 16, 128>}, {pipeline_mode = #tpu.pipeline_mode<synchronous>, transform_indices = @transform_3, window_bounds = array<i64: 4, 128>}, {pipeline_mode = #tpu.pipeline_mode<synchronous>, transform_indices = @transform_4, window_bounds = array<i64: 1, 128>}, {pipeline_mode = #tpu.pipeline_mode<synchronous>, transform_indices = @transform_5, window_bounds = array<i64: 1, 128>}, {transform_indices = @transform_6, window_bounds = array<i64: 1, 1>}, {transform_indices = @transform_7, window_bounds = array<i64: 1, 2>}]} {
    %c0 = arith.constant 0 : index
    %c0_0 = arith.constant 0 : index
    %0 = vector.load %arg1[%c0, %c0_0] : memref<2x16xf32, #tpu.memory_space<vmem>>, vector<2x16xf32>
    %c0_1 = arith.constant 0 : index
    %c0_2 = arith.constant 0 : index
    %1 = vector.load %arg3[%c0_1, %c0_2] : memref<16x128xf32, #tpu.memory_space<vmem>>, vector<16x128xf32>
    %cst = arith.constant dense<0.000000e+00> : vector<2x128xf32>
    %2 = tpu.matmul %0, %1, %cst {dimension_numbers = #tpu.dot_dimension_numbers<[1], [0], [0], [1], [0, 0, 1, 1], [], []>} : vector<2x16xf32>, vector<16x128xf32>, vector<2x128xf32> -> vector<2x128xf32>
    %c0_3 = arith.constant 0 : index
    %c0_4 = arith.constant 0 : index
    %3 = vector.load %arg2[%c0_3, %c0_4] : memref<2x4xf32, #tpu.memory_space<vmem>>, vector<2x4xf32>
    %c0_5 = arith.constant 0 : index
    %c0_6 = arith.constant 0 : index
    %4 = vector.load %arg4[%c0_5, %c0_6] : memref<4x128xf32, #tpu.memory_space<vmem>>, vector<4x128xf32>
    %cst_7 = arith.constant dense<0.000000e+00> : vector<2x128xf32>
    %5 = tpu.matmul %3, %4, %cst_7 {dimension_numbers = #tpu.dot_dimension_numbers<[1], [0], [0], [1], [0, 0, 1, 1], [], []>} : vector<2x4xf32>, vector<4x128xf32>, vector<2x128xf32> -> vector<2x128xf32>
    %6 = arith.addf %2, %5 : vector<2x128xf32>
    %c0_8 = arith.constant 0 : index
    %c0_9 = arith.constant 0 : index
    %7 = vector.load %arg5[%c0_8, %c0_9] : memref<1x128xf32, #tpu.memory_space<vmem>>, vector<1x128xf32>
    %8 = vector.broadcast %7 : vector<1x128xf32> to vector<2x128xf32>
    %9 = arith.addf %6, %8 : vector<2x128xf32>
    %cst_10 = arith.constant 0.000000e+00 : f32
    %10 = vector.broadcast %cst_10 : f32 to vector<2x128xf32>
    %11 = arith.maximumf %9, %10 : vector<2x128xf32>
    %c0_11 = arith.constant 0 : index
    %c0_12 = arith.constant 0 : index
    %12 = vector.load %arg6[%c0_11, %c0_12] : memref<1x128xf32, #tpu.memory_space<vmem>>, vector<1x128xf32>
    %cst_13 = arith.constant dense<0.000000e+00> : vector<1x2xf32>
    %13 = tpu.matmul %12, %11, %cst_13 {dimension_numbers = #tpu.dot_dimension_numbers<[1], [1], [0], [0], [0, 0, 1, 0], [], []>} : vector<1x128xf32>, vector<2x128xf32>, vector<1x2xf32> -> vector<1x2xf32>
    %c0_14 = arith.constant 0 : index
    %c0_15 = arith.constant 0 : index
    %14 = memref.load %arg7[%c0_14, %c0_15] : memref<1x1xf32, #tpu.memory_space<smem>>
    %15 = vector.broadcast %14 : f32 to vector<1x2xf32>
    %16 = arith.addf %13, %15 : vector<1x2xf32>
    %c0_16 = arith.constant 0 : index
    %c0_17 = arith.constant 0 : index
    %17 = vector.load %arg8[%c0_16, %c0_17] : memref<1x2xf32, #tpu.memory_space<vmem>>, vector<1x2xf32>
    tpu.vector_store %arg8[%c0_16, %c0_17], %16 {strides = array<i32>} : memref<1x2xf32, #tpu.memory_space<vmem>>, vector<1x2xf32>,
    return
  }
  func.func @transform_0(%arg0: i32) -> (i32, i32) {
    %c0_i32 = arith.constant 0 : i32
    %c0_i32_0 = arith.constant 0 : i32
    return %arg0, %c0_i32 : i32, i32
  }
  func.func @transform_1(%arg0: i32) -> (i32, i32) {
    %c0_i32 = arith.constant 0 : i32
    %c0_i32_0 = arith.constant 0 : i32
    return %arg0, %c0_i32 : i32, i32
  }
  func.func @transform_2(%arg0: i32) -> (i32, i32) {
    %c0_i32 = arith.constant 0 : i32
    %c0_i32_0 = arith.constant 0 : i32
    %c0_i32_1 = arith.constant 0 : i32
    return %c0_i32, %c0_i32_0 : i32, i32
  }
  func.func @transform_3(%arg0: i32) -> (i32, i32) {
    %c0_i32 = arith.constant 0 : i32
    %c0_i32_0 = arith.constant 0 : i32
    %c0_i32_1 = arith.constant 0 : i32
    return %c0_i32, %c0_i32_0 : i32, i32
  }
  func.func @transform_4(%arg0: i32) -> (i32, i32) {
    %c0_i32 = arith.constant 0 : i32
    %c0_i32_0 = arith.constant 0 : i32
    %c0_i32_1 = arith.constant 0 : i32
    return %c0_i32, %c0_i32_0 : i32, i32
  }
  func.func @transform_5(%arg0: i32) -> (i32, i32) {
    %c0_i32 = arith.constant 0 : i32
    %c0_i32_0 = arith.constant 0 : i32
    %c0_i32_1 = arith.constant 0 : i32
    return %c0_i32, %c0_i32_0 : i32, i32
  }
  func.func @transform_6(%arg0: i32) -> (i32, i32) {
    %c0_i32 = arith.constant 0 : i32
    %c0_i32_0 = arith.constant 0 : i32
    %c0_i32_1 = arith.constant 0 : i32
    return %c0_i32, %c0_i32_0 : i32, i32
  }
  func.func @transform_7(%arg0: i32) -> (i32, i32) {
    %c0_i32 = arith.constant 0 : i32
    %c0_i32_0 = arith.constant 0 : i32
    return %c0_i32, %arg0 : i32, i32
  }
}

</mosaic_0001>

<llo_original>
// kernel: tpu_custom_call.1
$region0: #{tpu_custom_call.1}
  #allocation0 [shape = 'u32[]', space=smem, size = 0x4, offset = 0x4, fixed_abs, tag = 'smem constant byte address 0x4 - core index']
  #allocation1 [shape = 'u32[144,128]{1,0:T(1,128)}', space=vmem, size = 0x12000, scoped, tag = 'internal scratch']
  #allocation2 [shape = 'f32[1,1]{1,0:T(1,128)S(6)}', space=smem, size = 0x200, scoped, tag = 'scoped memory for tpu_custom_call.1']
  %s0 = inlined_call_operand.vmem [shape: f32[2,16], index: 0, kind: input, shape index: {}]
  %s1 = inlined_call_operand.hbm [shape: f32[2,4], index: 1, kind: input, shape index: {}]
  %s2 = inlined_call_operand.hbm [shape: f32[16,128], index: 2, kind: input, shape index: {}]
  %s3 = inlined_call_operand.vmem [shape: f32[4,128], index: 3, kind: input, shape index: {}]
  %s4 = inlined_call_operand.vmem [shape: f32[1,128], index: 4, kind: input, shape index: {}]
  %s5 = inlined_call_operand.vmem [shape: f32[1,128], index: 5, kind: input, shape index: {}]
  %s6 = inlined_call_operand.<no memory space> [shape: f32[1,1], index: 6, kind: input, shape index: {}]
  %s7 = inlined_call_operand.hbm [shape: f32[1,2], index: 7, kind: output, shape index: {}]
  %s8 = sld [smem:[#allocation0]]
  $region46: #{tpu_custom_call.1} parent=0
    _
  %s10 = ssub.s32 1, %s8
  %s11 = scalar_select 0, %s10, %s8
  %12 = sst [smem:[#allocation2]] %s6
  $region1: #{tpu_custom_call.1} parent=0
    #allocation3 [shape = 'u8[1024]{0}', space=vmem, size = 0x400, scoped, tag = 'input window, operand 1, single buffered']
    #allocation4 [shape = 's32[1]{0}', space=sflag, size = 0x4, scoped, tag = 'scoped memory for tpu_custom_call.1']
    #allocation5 [shape = 's32[1]{0}', space=sflag, size = 0x4, scoped, tag = 'scoped memory for tpu_custom_call.1']
    #allocation6 [shape = 'u8[8192]{0}', space=vmem, size = 0x2000, scoped, tag = 'input window, operand 2, single buffered']
    #allocation7 [shape = 's32[1]{0}', space=sflag, size = 0x4, scoped, tag = 'scoped memory for tpu_custom_call.1']
    #allocation8 [shape = 'u8[512]{0}', space=vmem, size = 0x400, scoped, tag = 'output window, operand 0, single buffered']
    %13 = vsyncpa [#allocation4], 0
    %14 = vsyncpa [#allocation7], 0
    %15 = vsyncpa [#allocation5], 0
    // Predicated region
    $region2: #{tpu_custom_call.1} parent=1 // pred_check
      _
    $region3: #{tpu_custom_call.1} parent=1 // pred_check_branch
      %17 = sbr.rel (0) target = $region5
    $region4: #{tpu_custom_call.1} parent=1 // pred_region
      _
    $region5: #{tpu_custom_call.1} parent=1 // pred_fallthru
      _
    // Predicated region
    $region6: #{tpu_custom_call.1} parent=1 // pred_check
      _
    $region7: #{tpu_custom_call.1} parent=1 // pred_check_branch
      %19 = sbr.rel (0) target = $region9
    $region8: #{tpu_custom_call.1} parent=1 // pred_region
      %s21 = ssub.s32 32, 32
      %22 = vsyncadd [#allocation4], %s21
      %s24 = sshll.u32 [#allocation3], 4
      %s25 = int_to_ptr.vmem [resolvable:$true] %s24
      %27 = dma.hbm_to_vmem [thread:$0]  %s1, 32, %s25, [#allocation4]
    $region9: #{tpu_custom_call.1} parent=1 // pred_fallthru
      _
    // Predicated region
    $region10: #{tpu_custom_call.1} parent=1 // pred_check
      _
    $region11: #{tpu_custom_call.1} parent=1 // pred_check_branch
      %29 = sbr.rel (0) target = $region13
    $region12: #{tpu_custom_call.1} parent=1 // pred_region
      %s31 = ssub.s32 256, 256
      %32 = vsyncadd [#allocation7], %s31
      %s33 = sshll.u32 [#allocation6], 4
      %s34 = int_to_ptr.vmem [resolvable:$true] %s33
      %39 = dma.hbm_to_vmem [thread:$0]  %s2, 256, %s34, [#allocation7], 128, 128, 8
    $region13: #{tpu_custom_call.1} parent=1 // pred_fallthru
      _
    // Predicated region
    $region14: #{tpu_custom_call.1} parent=1 // pred_check
      _
    $region15: #{tpu_custom_call.1} parent=1 // pred_check_branch
      %41 = sbr.rel (0) target = $region17
    $region16: #{tpu_custom_call.1} parent=1 // pred_region
      _
    $region17: #{tpu_custom_call.1} parent=1 // pred_fallthru
      _
    // Predicated region
    $region18: #{tpu_custom_call.1} parent=1 // pred_check
      _
    $region19: #{tpu_custom_call.1} parent=1 // pred_check_branch
      %43 = sbr.rel (0) target = $region21
    $region20: #{tpu_custom_call.1} parent=1 // pred_region
      _
    $region21: #{tpu_custom_call.1} parent=1 // pred_fallthru
      _
    // Predicated region
    $region22: #{tpu_custom_call.1} parent=1 // pred_check
      _
    $region23: #{tpu_custom_call.1} parent=1 // pred_check_branch
      %45 = sbr.rel (0) target = $region25
    $region24: #{tpu_custom_call.1} parent=1 // pred_region
      _
    $region25: #{tpu_custom_call.1} parent=1 // pred_fallthru
      _
    // Predicated region
    $region26: #{tpu_custom_call.1} parent=1 // pred_check
      _
    $region27: #{tpu_custom_call.1} parent=1 // pred_check_branch
      %47 = sbr.rel (0) target = $region29
    $region28: #{tpu_custom_call.1} parent=1 // pred_region
      _
    $region29: #{tpu_custom_call.1} parent=1 // pred_fallthru
      _
    // Predicated region
    $region30: #{tpu_custom_call.1} parent=1 // pred_check
      _
    $region31: #{tpu_custom_call.1} parent=1 // pred_check_branch
      %49 = sbr.rel (0) target = $region33
    $region32: #{tpu_custom_call.1} parent=1 // pred_region
      %50 = dma.done [#allocation4], 32
    $region33: #{tpu_custom_call.1} parent=1 // pred_fallthru
      _
    // Predicated region
    $region34: #{tpu_custom_call.1} parent=1 // pred_check
      _
    $region35: #{tpu_custom_call.1} parent=1 // pred_check_branch
      %52 = sbr.rel (0) target = $region37
    $region36: #{tpu_custom_call.1} parent=1 // pred_region
      %53 = dma.done [#allocation7], 256
    $region37: #{tpu_custom_call.1} parent=1 // pred_fallthru
      _
    %v54 = vld [vmem:[%s0] sm:$0x3]
    %v55 = vld [vmem:[#allocation6] sm:$0xff]
    %v56 = vld [vmem:[#allocation6 + $0x8] sm:$0xff]
    %v57 = vld [vmem:[#allocation3] sm:$0x3]
    %v58 = vld [vmem:[%s3] sm:$0xf]
    %vm59 = vcmask 31744
    %v61 = vsel %vm59, %v57, 0
    %vm63 = vcmask 1043456
    %v65 = vsel %vm63, %v58, 0
    %67 = vmatprep.subr.mxu0 0.0
    %68 = vmatpush1.msra.mxu0 0.0
    %69 = vmatprep.subr.mxu0 0.0
    %70 = vmatpush1.msra.mxu0 0.0
    %71 = vmatprep.subr.mxu0 0.0
    %72 = vmatpush1.msra.mxu0 0.0
    %73 = vmatprep.subr.mxu0 0.0
    %74 = vmatpush1.msra.mxu0 0.0
    %75 = vmatprep.subr.mxu0 0.0
    %76 = vmatpush1.msra.mxu0 0.0
    %77 = vmatprep.subr.mxu0 0.0
    %78 = vmatpush1.msra.mxu0 0.0
    %79 = vmatprep.subr.mxu0 0.0
    %80 = vmatpush1.msra.mxu0 0.0
    %81 = vmatprep.subr.mxu0 0.0
    %82 = vmatpush1.msra.mxu0 0.0
    %83 = vmatprep.subr.mxu0 0.0
    %84 = vmatpush1.msra.mxu0 0.0
    %85 = vmatprep.subr.mxu0 0.0
    %86 = vmatpush1.msra.mxu0 0.0
    %87 = vmatprep.subr.mxu0 0.0
    %88 = vmatpush1.msra.mxu0 0.0
    %89 = vmatprep.subr.mxu0 0.0
    %90 = vmatpush1.msra.mxu0 0.0
    %91 = vmatprep.subr.mxu0 0.0
    %92 = vmatpush1.msra.mxu0 0.0
    %93 = vmatprep.subr.mxu0 0.0
    %94 = vmatpush1.msra.mxu0 0.0
    %95 = vmatprep.subr.mxu0 0.0
    %96 = vmatpush1.msra.mxu0 0.0
    %97 = vmatprep.subr.mxu0 0.0
    %98 = vmatpush1.msra.mxu0 %v65
    %99 = vmatprep.subr.mxu0 0.0
    %100 = vmatpush2.msra.mxu0 0.0
    %101 = vmatprep.subr.mxu0 0.0
    %102 = vmatpush2.msra.mxu0 0.0
    %103 = vmatprep.subr.mxu0 0.0
    %104 = vmatpush2.msra.mxu0 0.0
    %105 = vmatprep.subr.mxu0 0.0
    %106 = vmatpush2.msra.mxu0 0.0
    %107 = vmatprep.subr.mxu0 0.0
    %108 = vmatpush2.msra.mxu0 0.0
    %109 = vmatprep.subr.mxu0 0.0
    %110 = vmatpush2.msra.mxu0 0.0
    %111 = vmatprep.subr.mxu0 0.0
    %112 = vmatpush2.msra.mxu0 0.0
    %113 = vmatprep.subr.mxu0 0.0
    %114 = vmatpush2.msra.mxu0 0.0
    %115 = vmatprep.subr.mxu0 0.0
    %116 = vmatpush2.msra.mxu0 0.0
    %117 = vmatprep.subr.mxu0 0.0
    %118 = vmatpush2.msra.mxu0 0.0
    %119 = vmatprep.subr.mxu0 0.0
    %120 = vmatpush2.msra.mxu0 0.0
    %121 = vmatprep.subr.mxu0 0.0
    %122 = vmatpush2.msra.mxu0 0.0
    %123 = vmatprep.subr.mxu0 0.0
    %124 = vmatpush2.msra.mxu0 0.0
    %125 = vmatprep.subr.mxu0 0.0
    %126 = vmatpush2.msra.mxu0 0.0
    %127 = vmatprep.subr.mxu0 0.0
    %128 = vmatpush2.msra.mxu0 0.0
    %129 = vmatprep.subr.mxu0 0.0
    %130 = vmatpush2.msra.mxu0 0.0
    %131 = vmatprep.mubr.f32.mxu0 0.0
    %132 = vmatmul.mubr.f32.gmra.mxu0 %v61
    %v133 = vpop.f32.mrf.mxu0
    %v134 = vadd.f32 0.0, %v133
    %v135 = vpop.f32.mrf.mxu0
    %136 = vdwg.mxu0
    %vm137 = vcmask 130048
    %v139 = vsel %vm137, %v54, 0
    %141 = vmatprep.subr.mxu0 0.0
    %142 = vmatpush1.msra.mxu0 0.0
    %143 = vmatprep.subr.mxu0 0.0
    %144 = vmatpush1.msra.mxu0 0.0
    %145 = vmatprep.subr.mxu0 0.0
    %146 = vmatpush1.msra.mxu0 0.0
    %147 = vmatprep.subr.mxu0 0.0
    %148 = vmatpush1.msra.mxu0 0.0
    %149 = vmatprep.subr.mxu0 0.0
    %150 = vmatpush1.msra.mxu0 0.0
    %151 = vmatprep.subr.mxu0 0.0
    %152 = vmatpush1.msra.mxu0 0.0
    %153 = vmatprep.subr.mxu0 0.0
    %154 = vmatpush1.msra.mxu0 0.0
    %155 = vmatprep.subr.mxu0 0.0
    %156 = vmatpush1.msra.mxu0 0.0
    %157 = vmatprep.subr.mxu0 0.0
    %158 = vmatpush1.msra.mxu0 0.0
    %159 = vmatprep.subr.mxu0 0.0
    %160 = vmatpush1.msra.mxu0 0.0
    %161 = vmatprep.subr.mxu0 0.0
    %162 = vmatpush1.msra.mxu0 0.0
    %163 = vmatprep.subr.mxu0 0.0
    %164 = vmatpush1.msra.mxu0 0.0
    %165 = vmatprep.subr.mxu0 0.0
    %166 = vmatpush1.msra.mxu0 0.0
    %167 = vmatprep.subr.mxu0 0.0
    %168 = vmatpush1.msra.mxu0 0.0
    %169 = vmatprep.subr.mxu0 0.0
    %170 = vmatpush1.msra.mxu0 %v56
    %171 = vmatprep.subr.mxu0 0.0
    %172 = vmatpush1.msra.mxu0 %v55
    %173 = vmatprep.subr.mxu0 0.0
    %174 = vmatpush2.msra.mxu0 0.0
    %175 = vmatprep.subr.mxu0 0.0
    %176 = vmatpush2.msra.mxu0 0.0
    %177 = vmatprep.subr.mxu0 0.0
    %178 = vmatpush2.msra.mxu0 0.0
    %179 = vmatprep.subr.mxu0 0.0
    %180 = vmatpush2.msra.mxu0 0.0
    %181 = vmatprep.subr.mxu0 0.0
    %182 = vmatpush2.msra.mxu0 0.0
    %183 = vmatprep.subr.mxu0 0.0
    %184 = vmatpush2.msra.mxu0 0.0
    %185 = vmatprep.subr.mxu0 0.0
    %186 = vmatpush2.msra.mxu0 0.0
    %187 = vmatprep.subr.mxu0 0.0
    %188 = vmatpush2.msra.mxu0 0.0
    %189 = vmatprep.subr.mxu0 0.0
    %190 = vmatpush2.msra.mxu0 0.0
    %191 = vmatprep.subr.mxu0 0.0
    %192 = vmatpush2.msra.mxu0 0.0
    %193 = vmatprep.subr.mxu0 0.0
    %194 = vmatpush2.msra.mxu0 0.0
    %195 = vmatprep.subr.mxu0 0.0
    %196 = vmatpush2.msra.mxu0 0.0
    %197 = vmatprep.subr.mxu0 0.0
    %198 = vmatpush2.msra.mxu0 0.0
    %199 = vmatprep.subr.mxu0 0.0
    %200 = vmatpush2.msra.mxu0 0.0
    %201 = vmatprep.subr.mxu0 0.0
    %202 = vmatpush2.msra.mxu0 0.0
    %203 = vmatprep.subr.mxu0 0.0
    %204 = vmatpush2.msra.mxu0 0.0
    %205 = vmatprep.mubr.f32.mxu0 0.0
    %206 = vmatmul.mubr.f32.gmra.mxu0 %v139
    %v207 = vpop.f32.mrf.mxu0
    %v208 = vadd.f32 %v134, %v207
    %v209 = vpop.f32.mrf.mxu0
    %210 = vdwg.mxu0
    %v211 = vld [vmem:[%s4] sm:$0x1]
    %v213 = vlaneseq
    %v214 = vshrl.u32 %v213, 7
    %v215 = vsub.s32 0, %v214
    %v216 = vrot.slane %v211, %v215
    %v218 = vadd.f32 %v208, %v216
    %v219 = vmax.f32 %v218, 0.0
    %v220 = vld [vmem:[%s5] sm:$0x1]
    %s221 = sld [smem:[#allocation2]]
    %v222 = vstv %s221
    %223 = vmatprep.subr.mxu0 0.0
    %224 = vmatpush1.xpose.msra.mxu0 0.0
    %225 = vmatprep.subr.mxu0 0.0
    %226 = vmatpush1.xpose.msra.mxu0 0.0
    %227 = vmatprep.subr.mxu0 0.0
    %228 = vmatpush1.xpose.msra.mxu0 0.0
    %229 = vmatprep.subr.mxu0 0.0
    %230 = vmatpush1.xpose.msra.mxu0 0.0
    %231 = vmatprep.subr.mxu0 0.0
    %232 = vmatpush1.xpose.msra.mxu0 0.0
    %233 = vmatprep.subr.mxu0 0.0
    %234 = vmatpush1.xpose.msra.mxu0 0.0
    %235 = vmatprep.subr.mxu0 0.0
    %236 = vmatpush1.xpose.msra.mxu0 0.0
    %237 = vmatprep.subr.mxu0 0.0
    %238 = vmatpush1.xpose.msra.mxu0 0.0
    %239 = vmatprep.subr.mxu0 0.0
    %240 = vmatpush1.xpose.msra.mxu0 0.0
    %241 = vmatprep.subr.mxu0 0.0
    %242 = vmatpush1.xpose.msra.mxu0 0.0
    %243 = vmatprep.subr.mxu0 0.0
    %244 = vmatpush1.xpose.msra.mxu0 0.0
    %245 = vmatprep.subr.mxu0 0.0
    %246 = vmatpush1.xpose.msra.mxu0 0.0
    %247 = vmatprep.subr.mxu0 0.0
    %248 = vmatpush1.xpose.msra.mxu0 0.0
    %249 = vmatprep.subr.mxu0 0.0
    %250 = vmatpush1.xpose.msra.mxu0 0.0
    %251 = vmatprep.subr.mxu0 0.0
    %252 = vmatpush1.xpose.msra.mxu0 0.0
    %253 = vmatprep.subr.mxu0 0.0
    %254 = vmatpush1.xpose.msra.mxu0 %v219
    %255 = vmatprep.subr.mxu0 0.0
    %256 = vmatpush2.xpose.msra.mxu0 0.0
    %257 = vmatprep.subr.mxu0 0.0
    %258 = vmatpush2.xpose.msra.mxu0 0.0
    %259 = vmatprep.subr.mxu0 0.0
    %260 = vmatpush2.xpose.msra.mxu0 0.0
    %261 = vmatprep.subr.mxu0 0.0
    %262 = vmatpush2.xpose.msra.mxu0 0.0
    %263 = vmatprep.subr.mxu0 0.0
    %264 = vmatpush2.xpose.msra.mxu0 0.0
    %265 = vmatprep.subr.mxu0 0.0
    %266 = vmatpush2.xpose.msra.mxu0 0.0
    %267 = vmatprep.subr.mxu0 0.0
    %268 = vmatpush2.xpose.msra.mxu0 0.0
    %269 = vmatprep.subr.mxu0 0.0
    %270 = vmatpush2.xpose.msra.mxu0 0.0
    %271 = vmatprep.subr.mxu0 0.0
    %272 = vmatpush2.xpose.msra.mxu0 0.0
    %273 = vmatprep.subr.mxu0 0.0
    %274 = vmatpush2.xpose.msra.mxu0 0.0
    %275 = vmatprep.subr.mxu0 0.0
    %276 = vmatpush2.xpose.msra.mxu0 0.0
    %277 = vmatprep.subr.mxu0 0.0
    %278 = vmatpush2.xpose.msra.mxu0 0.0
    %279 = vmatprep.subr.mxu0 0.0
    %280 = vmatpush2.xpose.msra.mxu0 0.0
    %281 = vmatprep.subr.mxu0 0.0
    %282 = vmatpush2.xpose.msra.mxu0 0.0
    %283 = vmatprep.subr.mxu0 0.0
    %284 = vmatpush2.xpose.msra.mxu0 0.0
    %285 = vmatprep.subr.mxu0 0.0
    %286 = vmatpush2.xpose.msra.mxu0 0.0
    %287 = vmatprep.mubr.f32.mxu0 0.0
    %288 = vmatmul.mubr.f32.gmra.mxu0 %v220
    %v289 = vpop.f32.mrf.mxu0
    %v290 = vadd.f32 %v222, %v289
    %v291 = vpop.f32.mrf.mxu0
    %292 = vdwg.mxu0
    %vm293 = vcmask 8192
    %294 = vst.msk [vmem:[#allocation8] sm:$0x1] %vm293, %v290
    // Predicated region
    $region38: #{tpu_custom_call.1} parent=1 // pred_check
      _
    $region39: #{tpu_custom_call.1} parent=1 // pred_check_branch
      %296 = sbr.rel (0) target = $region41
    $region40: #{tpu_custom_call.1} parent=1 // pred_region
      %s298 = ssub.s32 16, 16
      %299 = vsyncadd [#allocation5], %s298
      %s301 = sshll.u32 [#allocation8], 4
      %s302 = int_to_ptr.vmem [resolvable:$true] %s301
      %304 = dma.vmem_to_hbm [thread:$0]  %s302, 16, %s7, [#allocation5]
    $region41: #{tpu_custom_call.1} parent=1 // pred_fallthru
      _
    // Predicated region
    $region42: #{tpu_custom_call.1} parent=1 // pred_check
      _
    $region43: #{tpu_custom_call.1} parent=1 // pred_check_branch
      %306 = sbr.rel (0) target = $region45
    $region44: #{tpu_custom_call.1} parent=1 // pred_region
      %307 = dma.done [#allocation5], 16
    $region45: #{tpu_custom_call.1} parent=1 // pred_fallthru
      _
    %308 = vsyncpa [#allocation4], 1
    %309 = vsyncpa [#allocation7], 1
    %310 = vsyncpa [#allocation5], 1

</llo_original>
